<compile_context>
chip_gen: v6e
topology: v6e:2x2x1
jax: 0.10.0
libtpu: 0.0.40
codegen_flags: <defaults>
</compile_context>

<pallas_src>
import jax
import jax.numpy as jnp
from jax.experimental import pallas as pl
from jax.experimental.pallas import tpu as pltpu


def _round_up(v, m):
    return (v + m - 1) // m * m


def _physical_vmem_bytes():
    """Per-TensorCore VMEM: 128 MiB on v5e/v5p/v6e, 64 MiB on v7x.

    Identified from device_kind; unknown generations use the smallest value so
    the kernel never over-subscribes VMEM.
    """
    try:
        kind = jax.devices()[0].device_kind.lower()
    except Exception:
        kind = ""
    if "v7" in kind or "7x" in kind:
        return 64 * 1024 * 1024
    if "v5" in kind or "v6" in kind:
        return 128 * 1024 * 1024
    return 64 * 1024 * 1024


def _vmem_plan(vmem_limit_bytes=None, vmem_budget_bytes=None):
    """Returns (explicit compiler vmem limit, our own accounting budget)."""
    phys = _physical_vmem_bytes()
    if vmem_limit_bytes is None:
        # The scoped defaults (16 MiB on v5e, 32 MiB on v6e/v7x) are far below
        # physical VMEM — always raise the limit explicitly.
        vmem_limit_bytes = min(phys - 8 * 1024 * 1024, 120 * 1024 * 1024)
    if vmem_budget_bytes is None:
        # Leave headroom under the limit for compiler-internal temporaries.
        vmem_budget_bytes = int(vmem_limit_bytes * 0.8)
    return vmem_limit_bytes, vmem_budget_bytes


def _l2norm_rows(acc):
    # F.normalize(h, dim=-1, p=2): h / max(||h||, 1e-12)
    # == h * rsqrt(max(||h||^2, 1e-24)); all-zero (padded) rows stay zero.
    sumsq = jnp.sum(acc * acc, axis=-1, keepdims=True)
    return acc * jax.lax.rsqrt(jnp.maximum(sumsq, 1e-24))


# ----------------------------------------------------------------------------
# Kernels
# ----------------------------------------------------------------------------
def _spmm_l2norm_kernel(adj_ref, x_ref, o_ref, *extra_out):
    """Single pass: o = l2normalize(adj_strip @ x), x fully VMEM-resident.

    Optional second output: bf16 copy of o (next layer's matmul input),
    fusing the recast that used to be a separate HBM pass.
    """
    acc = jnp.dot(adj_ref[...], x_ref[...], preferred_element_type=jnp.float32)
    h = _l2norm_rows(acc)
    o_ref[...] = h.astype(o_ref.dtype)
    if extra_out:
        extra_out[0][...] = h.astype(extra_out[0].dtype)


def _spmm_l2norm_ktiled_kernel(adj_ref, x_ref, *rest):
    """K-tiled fallback with an f32 accumulator; epilogue on the last k step."""
    acc_ref = rest[-1]          # scratch
    out_refs = rest[:-1]        # 1 or 2 outputs (f32 [+ bf16 copy])
    k = pl.program_id(1)

    @pl.when(k == 0)
    def _():
        acc_ref[...] = jnp.zeros_like(acc_ref)

    acc_ref[...] += jnp.dot(
        adj_ref[...], x_ref[...], preferred_element_type=jnp.float32)

    @pl.when(k == pl.num_programs(1) - 1)
    def _():
        h = _l2norm_rows(acc_ref[...])
        for o in out_refs:
            o[...] = h.astype(o.dtype)


def _fused_layers_kernel(adj_ref, x_ref, o_ref, h_ref, sum_ref):
    """All `layers` conv steps in one kernel with adj held VMEM-resident.

    Grid axis 0 is the layer index. h_ref carries the (compute-dtype) input to
    the current layer, sum_ref the running f32 sum of [x, h_1, ..., h_l].
    Used only for layers > 1 (the averaging is always applied).
    """
    layer = pl.program_id(0)

    @pl.when(layer == 0)
    def _():
        x = x_ref[...]
        h_ref[...] = x.astype(h_ref.dtype)
        sum_ref[...] = x

    acc = jnp.dot(adj_ref[...], h_ref[...], preferred_element_type=jnp.float32)
    h = _l2norm_rows(acc)
    sum_ref[...] += h
    h_ref[...] = h.astype(h_ref.dtype)

    @pl.when(layer == pl.num_programs(0) - 1)
    def _():
        o_ref[...] = (sum_ref[...] *
                      (1.0 / (pl.num_programs(0) + 1.0))).astype(o_ref.dtype)


# ----------------------------------------------------------------------------
# Wrappers
# ----------------------------------------------------------------------------
def spmm_l2norm(adj, x, *, vmem_limit_bytes, vmem_budget_bytes,
                emit_bf16=False, out_dtype=jnp.float32, force_ktiled=False):
    """out = l2normalize_rows(adj @ x) (+ optional fused bf16 copy of out).

    Expects pre-padded, aligned inputs: adj (M, K), x (K, D) with
    M % 128 == K % 128 == D % 128 == 0.
    """
    M, K = adj.shape
    K2, D = x.shape
    assert K == K2
    assert M % 128 == 0 and K % 128 == 0 and D % 128 == 0

    adj_b = adj.dtype.itemsize
    x_b = x.dtype.itemsize
    out_b = jnp.dtype(out_dtype).itemsize

    out_shape = [jax.ShapeDtypeStruct((M, D), out_dtype)]
    if emit_bf16:
        out_shape.append(jax.ShapeDtypeStruct((M, D), jnp.bfloat16))
    out_shape = tuple(out_shape)

    def out_tile_bytes(tm):
        b = 2 * tm * D * out_b                 # double-buffered f32 out tiles
        if emit_bf16:
            b += 2 * tm * D * 2                # double-buffered bf16 out tiles
        return b

    # -------- x-resident single-pass path -----------------------------------
    def resident_bytes(tm):
        return (2 * tm * K * adj_b             # double-buffered adj row strips
                + 2 * K * D * x_b              # x: constant index_map, but the
                                               #   pipeline still holds 2 bufs
                + out_tile_bytes(tm)
                + 2 * tm * D * 4)              # slop: matmul/epilogue temps

    tm_resident = None
    if not force_ktiled:
        cands = [t for t in (1024, 512, 256, 128) if M % t == 0]
        # Prefer >= 2 row steps so the "parallel" axis shards across v7x's two
        # TensorCores; retry smaller tm before giving up on this path.
        for need_multi_step in (True, False):
            for t in cands:
                if need_multi_step and M // t < 2:
                    continue
                if resident_bytes(t) <= vmem_budget_bytes:
                    tm_resident = t
                    break
            if tm_resident is not None:
                break

    if tm_resident is not None:
        tm = tm_resident
        outs = pl.pallas_call(
            _spmm_l2norm_kernel,
            out_shape=out_shape,
            grid_spec=pltpu.PrefetchScalarGridSpec(
                num_scalar_prefetch=0,
                grid=(M // tm,),
                in_specs=[
                    pl.BlockSpec((tm, K), lambda i: (i, 0)),   # adj row strip
                    pl.BlockSpec((K, D), lambda i: (0, 0)),    # x, resident
                ],
                out_specs=tuple(pl.BlockSpec((tm, D), lambda i: (i, 0))
                                for _ in out_shape),
            ),
            compiler_params=pltpu.CompilerParams(
                dimension_semantics=("parallel",),
                vmem_limit_bytes=vmem_limit_bytes),
        )(adj, x)
        return outs if emit_bf16 else outs[0]

    # -------- K-tiled fallback (very large K) --------------------------------
    tm_cands = [t for t in (512, 256, 128) if M % t == 0]
    tm = next((t for t in tm_cands if M // t >= 2), tm_cands[-1])

    def ktiled_bytes(tk):
        return (2 * tm * tk * adj_b + 2 * tk * D * x_b
                + tm * D * 4                       # f32 accumulator scratch
                + out_tile_bytes(tm)
                + 2 * tm * D * 4)

    tk_cands = [t for t in (4096, 2048, 1024, 512, 256, 128) if K % t == 0]
    tk = next((t for t in tk_cands if ktiled_bytes(t) <= vmem_budget_bytes),
              tk_cands[-1])

    outs = pl.pallas_call(
        _spmm_l2norm_ktiled_kernel,
        out_shape=out_shape,
        grid_spec=pltpu.PrefetchScalarGridSpec(
            num_scalar_prefetch=0,
            grid=(M // tm, K // tk),
            in_specs=[
                pl.BlockSpec((tm, tk), lambda i, k: (i, k)),
                pl.BlockSpec((tk, D), lambda i, k: (k, 0)),
            ],
            out_specs=tuple(pl.BlockSpec((tm, D), lambda i, k: (i, 0))
                            for _ in out_shape),
            scratch_shapes=[pltpu.VMEM((tm, D), jnp.float32)],
        ),
        compiler_params=pltpu.CompilerParams(
            dimension_semantics=("parallel", "arbitrary"),
            vmem_limit_bytes=vmem_limit_bytes),
    )(adj, x)
    return outs if emit_bf16 else outs[0]


def _fused_layers_bytes(P, Dp, adj_itemsize, h_itemsize):
    return (2 * P * P * adj_itemsize   # adj (double-buffered by the pipeline)
            + 2 * P * Dp * 4           # x (f32)
            + 2 * P * Dp * 4           # output (f32)
            + P * Dp * h_itemsize      # h scratch (compute dtype)
            + P * Dp * 4               # running-sum scratch (f32)
            + 3 * P * Dp * 4)          # slop: matmul / epilogue temporaries


def prepare_adjacency(adj, *, compute_dtype=jnp.bfloat16):
    """Pad the (N, N) dense adjacency to a lane/MXU-aligned (P, P) matrix in
    the matmul dtype. Call once and pass via `adj_prepared=` when the same
    adjacency is reused across forward calls — the pad/cast writes P^2 bytes
    of HBM, comparable to a full layer's adjacency read."""
    N = adj.shape[0]
    assert adj.shape == (N, N)
    P = _round_up(N, 128)
    return jnp.zeros((P, P), compute_dtype).at[:N, :N].set(
        adj.astype(compute_dtype))


def global_item_conv(x, adj=None, *, layers=1, feat_drop=0.0,
                     dynamic_weights=False, compute_dtype=jnp.bfloat16,
                     fuse_layers=True, adj_prepared=None,
                     vmem_limit_bytes=None, vmem_budget_bytes=None,
                     force_ktiled=False):
    """JAX/Pallas equivalent of GlobalItemConv.forward(x, adj)."""
    # TODO(synk): dynamic_weights rewrites only the *nonzero* sparse values
    # (max_w - w + 1); with a densified adjacency that would also rewrite the
    # zeros, so it is not applied here (module default is False).
    del dynamic_weights
    del feat_drop  # module default p = 0.0 -> Dropout is the identity
    # TODO(synk): the torch adjacency is sparse; a block-sparse SpMM (scalar-
    # prefetched per-row-strip nonzero block lists) and int8/fp8 adjacency
    # quantization would further cut HBM traffic but need accuracy validation.

    if layers <= 0:
        return x

    N, D = x.shape
    P = _round_up(N, 128)
    Dp = _round_up(D, 128)

    vmem_limit_bytes, vmem_budget_bytes = _vmem_plan(
        vmem_limit_bytes, vmem_budget_bytes)

    if adj_prepared is not None:
        adj_p = adj_prepared
        assert adj_p.shape == (P, P)
    else:
        assert adj is not None and adj.shape == (N, N)
        adj_p = prepare_adjacency(adj, compute_dtype=compute_dtype)

    # Pad once to lane/MXU-aligned shapes; loop in padded space, slice at end.
    # Padded rows/cols are zero and stay zero through matmul + clamped L2 norm.
    x_p32 = jnp.zeros((P, Dp), jnp.float32).at[:N, :D].set(
        x.astype(jnp.float32))

    # layers > 1 fast path: adjacency held VMEM-resident across all layers;
    # per-layer normalize, recast and the final averaging fused in-kernel.
    fused_fit = (_fused_layers_bytes(P, Dp, adj_p.dtype.itemsize,
                                     jnp.dtype(compute_dtype).itemsize)
                 <= vmem_budget_bytes)
    if layers > 1 and fuse_layers and not force_ktiled and fused_fit:
        out = pl.pallas_call(
            _fused_layers_kernel,
            out_shape=jax.ShapeDtypeStruct((P, Dp), jnp.float32),
            grid_spec=pltpu.PrefetchScalarGridSpec(
                num_scalar_prefetch=0,
                grid=(layers,),
                in_specs=[
                    pl.BlockSpec((P, P), lambda l: (0, 0)),    # adj, resident
                    pl.BlockSpec((P, Dp), lambda l: (0, 0)),   # x, resident
                ],
                out_specs=pl.BlockSpec((P, Dp), lambda l: (0, 0)),
                scratch_shapes=[pltpu.VMEM((P, Dp), compute_dtype),
                                pltpu.VMEM((P, Dp), jnp.float32)],
            ),
            compiler_params=pltpu.CompilerParams(
                dimension_semantics=("arbitrary",),
                vmem_limit_bytes=vmem_limit_bytes),
        )(adj_p, x_p32)
        return out[:N, :D].astype(x.dtype)

    # Streaming path: one kernel per layer; adjacency row strips stream from
    # HBM while x stays VMEM-resident (or a K-tiled accumulator fallback).
    h_f32 = x_p32
    h_in = x_p32.astype(compute_dtype)
    running_sum = x_p32
    for layer in range(layers):
        is_last = layer == layers - 1
        want_dual = (not is_last) and compute_dtype == jnp.bfloat16
        if want_dual:
            h_f32, h_in = spmm_l2norm(
                adj_p, h_in, emit_bf16=True, out_dtype=jnp.float32,
                vmem_limit_bytes=vmem_limit_bytes,
                vmem_budget_bytes=vmem_budget_bytes,
                force_ktiled=force_ktiled)
        else:
            h_f32 = spmm_l2norm(
                adj_p, h_in, emit_bf16=False, out_dtype=jnp.float32,
                vmem_limit_bytes=vmem_limit_bytes,
                vmem_budget_bytes=vmem_budget_bytes,
                force_ktiled=force_ktiled)
            if not is_last:
                h_in = h_f32.astype(compute_dtype)
        if layers > 1:
            # TODO(synk): on this (non-fused) multi-layer path the running sum
            # is one cheap elementwise HBM pass per layer; it stays in JAX.
            running_sum = running_sum + h_f32

    if layers > 1:
        h_f32 = running_sum / (layers + 1)

    return h_f32[:N, :D].astype(x.dtype)


# ----------------------------------------------------------------------------
# Self-test
# ----------------------------------------------------------------------------
if __name__ == "__main__":
    key = jax.random.PRNGKey(0)
    k_x, k_a = jax.random.split(key)

    N, D = 128, 64  # small graph: 128 nodes, 64-dim features
    x = jax.random.normal(k_x, (N, D), dtype=jnp.float32)

    # Sparse-ish nonnegative adjacency (what the torch sparse matrix would
    # hold), densified for the kernel.
    a = jax.random.uniform(k_a, (N, N), dtype=jnp.float32)
    adj = jnp.where(a > 0.9, a, 0.0)

    def reference(x, adj, layers, matmul_dtype=None):
        """Pure-JAX reference; matmul_dtype mirrors the kernel's bf16 inputs."""
        def cast(v):
            if matmul_dtype is None:
                return v
            return v.astype(matmul_dtype).astype(jnp.float32)
        adj_c = cast(adj)
        h = x
        final = [x]
        for _ in range(layers):
            hm = adj_c @ cast(h)
            nrm = jnp.sqrt(jnp.sum(hm * hm, axis=-1, keepdims=True))
            h = hm / jnp.maximum(nrm, 1e-12)
            final.append(h)
        if layers > 1:
            h = sum(final) / (layers + 1)
        return h

    def check(out, layers, name):
        out = jax.block_until_ready(out)
        ref_bf16 = reference(x, adj, layers, matmul_dtype=jnp.bfloat16)
        ref_f32 = reference(x, adj, layers, matmul_dtype=None)
        err_b = float(jnp.max(jnp.abs(out - ref_bf16)))
        err_f = float(jnp.max(jnp.abs(out - ref_f32)))
        # Tight vs the bf16-mirroring reference; bounded drift vs full f32.
        assert jnp.allclose(out, ref_bf16, atol=2e-3, rtol=2e-3), (name, err_b)
        assert jnp.allclose(out, ref_f32, atol=2e-2, rtol=2e-2), (name, err_f)

    # 1) single layer -> x-resident streaming kernel
    check(global_item_conv(x, adj, layers=1), 1, "layers1_streaming")
    # 2) two layers -> fused multi-layer kernel (adj VMEM-resident)
    check(global_item_conv(x, adj, layers=2), 2, "layers2_fused")
    # 3) two layers, fusion off, pre-prepared adjacency
    #    -> streaming kernel with dual f32/bf16 outputs + JAX averaging
    adj_pre = prepare_adjacency(adj)
    check(global_item_conv(x, adj_prepared=adj_pre, layers=2,
                           fuse_layers=False), 2, "layers2_streaming")
    # 4) K-tiled accumulator fallback (forced; covers the very-large-K path)
    check(global_item_conv(x, adj, layers=2, force_ktiled=True), 2,
          "layers2_ktiled")

    print("KERNEL_OK")
</pallas_src>

<mosaic_0001>
module attributes {stable_mosaic.version = 11 : i64} {
  func.func @_spmm_l2norm_kernel(%arg0: i32, %arg1: memref<128x128xbf16, #tpu.memory_space<vmem>>, %arg2: memref<128x128xbf16, #tpu.memory_space<vmem>>, %arg3: memref<128x128xf32, #tpu.memory_space<vmem>>) attributes {dimension_semantics = [#tpu.dimension_semantics<parallel>], iteration_bounds = array<i64: 1>, scalar_prefetch = 0 : i64, scratch_operands = 0 : i64, tpu.core_type = #tpu.core_type<tc>, window_params = [{transform_indices = @transform_0, window_bounds = array<i64: 128, 128>}, {pipeline_mode = #tpu.pipeline_mode<synchronous>, transform_indices = @transform_1, window_bounds = array<i64: 128, 128>}, {transform_indices = @transform_2, window_bounds = array<i64: 128, 128>}]} {
    %c0 = arith.constant 0 : index
    %c0_0 = arith.constant 0 : index
    %0 = vector.load %arg1[%c0, %c0_0] : memref<128x128xbf16, #tpu.memory_space<vmem>>, vector<128x128xbf16>
    %c0_1 = arith.constant 0 : index
    %c0_2 = arith.constant 0 : index
    %1 = vector.load %arg2[%c0_1, %c0_2] : memref<128x128xbf16, #tpu.memory_space<vmem>>, vector<128x128xbf16>
    %cst = arith.constant dense<0.000000e+00> : vector<128x128xf32>
    %2 = tpu.matmul %0, %1, %cst {dimension_numbers = #tpu.dot_dimension_numbers<[1], [0], [0], [1], [0, 0, 1, 1], [], []>} : vector<128x128xbf16>, vector<128x128xbf16>, vector<128x128xf32> -> vector<128x128xf32>
    %3 = arith.mulf %2, %2 : vector<128x128xf32>
    %cst_3 = arith.constant dense<0.000000e+00> : vector<128xf32>
    %4 = vector.multi_reduction <add>, %3, %cst_3 [1] : vector<128x128xf32> to vector<128xf32>
    %5 = vector.shape_cast %4 : vector<128xf32> to vector<128x1xf32>
    %cst_4 = arith.constant 1.000000e-24 : f32
    %6 = vector.broadcast %cst_4 : f32 to vector<128x1xf32>
    %7 = arith.maximumf %5, %6 : vector<128x1xf32>
    %8 = math.rsqrt %7 : vector<128x1xf32>
    %9 = vector.broadcast %8 : vector<128x1xf32> to vector<128x128xf32>
    %10 = arith.mulf %2, %9 : vector<128x128xf32>
    %c0_5 = arith.constant 0 : index
    %c0_6 = arith.constant 0 : index
    %11 = vector.load %arg3[%c0_5, %c0_6] : memref<128x128xf32, #tpu.memory_space<vmem>>, vector<128x128xf32>
    tpu.vector_store %arg3[%c0_5, %c0_6], %10 {strides = array<i32>} : memref<128x128xf32, #tpu.memory_space<vmem>>, vector<128x128xf32>,
    return
  }
  func.func @transform_0(%arg0: i32) -> (i32, i32) {
    %c0_i32 = arith.constant 0 : i32
    %c0_i32_0 = arith.constant 0 : i32
    return %arg0, %c0_i32 : i32, i32
  }
  func.func @transform_1(%arg0: i32) -> (i32, i32) {
    %c0_i32 = arith.constant 0 : i32
    %c0_i32_0 = arith.constant 0 : i32
    %c0_i32_1 = arith.constant 0 : i32
    return %c0_i32, %c0_i32_0 : i32, i32
  }
  func.func @transform_2(%arg0: i32) -> (i32, i32) {
    %c0_i32 = arith.constant 0 : i32
    %c0_i32_0 = arith.constant 0 : i32
    return %arg0, %c0_i32 : i32, i32
  }
}

</mosaic_0001>

<llo_original>
// kernel: tpu_custom_call.1
$region0: #{tpu_custom_call.1}
  #allocation0 [shape = 'u32[]', space=smem, size = 0x4, offset = 0x4, fixed_abs, tag = 'smem constant byte address 0x4 - core index']
  #allocation1 [shape = 'u32[144,128]{1,0:T(1,128)}', space=vmem, size = 0x12000, scoped, tag = 'internal scratch']
  %s0 = inlined_call_operand.hbm [shape: bf16[128,128], index: 0, kind: input, shape index: {}]
  %s1 = inlined_call_operand.hbm [shape: bf16[128,128], index: 1, kind: input, shape index: {}]
  %s2 = inlined_call_operand.hbm [shape: f32[128,128], index: 2, kind: output, shape index: {}]
  %s3 = sld [smem:[#allocation0]]
  $region26: #{tpu_custom_call.1} parent=0
    _
  %s5 = ssub.s32 1, %s3
  %s6 = scalar_select 0, %s5, %s3
  $region1: #{tpu_custom_call.1} parent=0
    #allocation2 [shape = 'u8[32768]{0}', space=vmem, size = 0x8000, scoped, tag = 'input window, operand 0, single buffered']
    #allocation3 [shape = 's32[1]{0}', space=sflag, size = 0x4, scoped, tag = 'scoped memory for tpu_custom_call.1']
    #allocation4 [shape = 's32[1]{0}', space=sflag, size = 0x4, scoped, tag = 'scoped memory for tpu_custom_call.1']
    #allocation5 [shape = 'u8[32768]{0}', space=vmem, size = 0x8000, scoped, tag = 'input window, operand 1, single buffered']
    #allocation6 [shape = 's32[1]{0}', space=sflag, size = 0x4, scoped, tag = 'scoped memory for tpu_custom_call.1']
    #allocation7 [shape = 'u8[65536]{0}', space=vmem, size = 0x10000, scoped, tag = 'output window, operand 0, single buffered']
    %7 = vsyncpa [#allocation3], 0
    %8 = vsyncpa [#allocation6], 0
    %9 = vsyncpa [#allocation4], 0
    // Predicated region
    $region2: #{tpu_custom_call.1} parent=1 // pred_check
      _
    $region3: #{tpu_custom_call.1} parent=1 // pred_check_branch
      %11 = sbr.rel (0) target = $region5
    $region4: #{tpu_custom_call.1} parent=1 // pred_region
      %s13 = ssub.s32 1024, 1024
      %14 = vsyncadd [#allocation3], %s13
      %s15 = sshll.u32 [#allocation2], 4
      %s16 = int_to_ptr.vmem [resolvable:$true] %s15
      %21 = dma.hbm_to_vmem [thread:$0]  %s0, 1024, %s16, [#allocation3], 64, 64, 4
    $region5: #{tpu_custom_call.1} parent=1 // pred_fallthru
      _
    // Predicated region
    $region6: #{tpu_custom_call.1} parent=1 // pred_check
      _
    $region7: #{tpu_custom_call.1} parent=1 // pred_check_branch
      %23 = sbr.rel (0) target = $region9
    $region8: #{tpu_custom_call.1} parent=1 // pred_region
      %s25 = ssub.s32 1024, 1024
      %26 = vsyncadd [#allocation6], %s25
      %s27 = sshll.u32 [#allocation5], 4
      %s28 = int_to_ptr.vmem [resolvable:$true] %s27
      %33 = dma.hbm_to_vmem [thread:$0]  %s1, 1024, %s28, [#allocation6], 64, 64, 4
    $region9: #{tpu_custom_call.1} parent=1 // pred_fallthru
      _
    // Predicated region
    $region10: #{tpu_custom_call.1} parent=1 // pred_check
      _
    $region11: #{tpu_custom_call.1} parent=1 // pred_check_branch
      %35 = sbr.rel (0) target = $region13
    $region12: #{tpu_custom_call.1} parent=1 // pred_region
      %36 = dma.done [#allocation3], 1024
    $region13: #{tpu_custom_call.1} parent=1 // pred_fallthru
      _
    // Predicated region
    $region14: #{tpu_custom_call.1} parent=1 // pred_check
      _
    $region15: #{tpu_custom_call.1} parent=1 // pred_check_branch
      %38 = sbr.rel (0) target = $region17
    $region16: #{tpu_custom_call.1} parent=1 // pred_region
      %39 = dma.done [#allocation6], 1024
    $region17: #{tpu_custom_call.1} parent=1 // pred_fallthru
      _
    %v41 = vld [vmem:[#allocation2] sm:$0xf]
    %v42 = vld [vmem:[#allocation2 + $0x4] sm:$0xf]
    %v43 = vld [vmem:[#allocation2 + $0x8] sm:$0xf]
    %v44 = vld [vmem:[#allocation2 + $0xc] sm:$0xf]
    %v45 = vld [vmem:[#allocation2 + $0x10] sm:$0xf]
    %v46 = vld [vmem:[#allocation2 + $0x14] sm:$0xf]
    %v47 = vld [vmem:[#allocation2 + $0x18] sm:$0xf]
    %v48 = vld [vmem:[#allocation2 + $0x1c] sm:$0xf]
    %v49 = vld [vmem:[#allocation2 + $0x20] sm:$0xf]
    %v50 = vld [vmem:[#allocation2 + $0x24] sm:$0xf]
    %v51 = vld [vmem:[#allocation2 + $0x28] sm:$0xf]
    %v52 = vld [vmem:[#allocation2 + $0x2c] sm:$0xf]
    %v53 = vld [vmem:[#allocation2 + $0x30] sm:$0xf]
    %v54 = vld [vmem:[#allocation2 + $0x34] sm:$0xf]
    %v55 = vld [vmem:[#allocation2 + $0x38] sm:$0xf]
    %v56 = vld [vmem:[#allocation2 + $0x3c] sm:$0xf]
    %v57 = vld [vmem:[#allocation5] sm:$0xf]
    %v58 = vld [vmem:[#allocation5 + $0x4] sm:$0xf]
    %v59 = vld [vmem:[#allocation5 + $0x8] sm:$0xf]
    %v60 = vld [vmem:[#allocation5 + $0xc] sm:$0xf]
    %v61 = vld [vmem:[#allocation5 + $0x10] sm:$0xf]
    %v62 = vld [vmem:[#allocation5 + $0x14] sm:$0xf]
    %v63 = vld [vmem:[#allocation5 + $0x18] sm:$0xf]
    %v64 = vld [vmem:[#allocation5 + $0x1c] sm:$0xf]
    %v65 = vld [vmem:[#allocation5 + $0x20] sm:$0xf]
    %v66 = vld [vmem:[#allocation5 + $0x24] sm:$0xf]
    %v67 = vld [vmem:[#allocation5 + $0x28] sm:$0xf]
    %v68 = vld [vmem:[#allocation5 + $0x2c] sm:$0xf]
    %v69 = vld [vmem:[#allocation5 + $0x30] sm:$0xf]
    %v70 = vld [vmem:[#allocation5 + $0x34] sm:$0xf]
    %v71 = vld [vmem:[#allocation5 + $0x38] sm:$0xf]
    %v72 = vld [vmem:[#allocation5 + $0x3c] sm:$0xf]
    %v89 = vunpack.c.l.b16 %v41
    %v90 = vunpack.c.l.b16 %v42
    %v91 = vunpack.c.l.b16 %v43
    %v92 = vunpack.c.l.b16 %v44
    %v93 = vunpack.c.l.b16 %v45
    %v94 = vunpack.c.l.b16 %v46
    %v95 = vunpack.c.l.b16 %v47
    %v96 = vunpack.c.l.b16 %v48
    %v97 = vunpack.c.l.b16 %v49
    %v98 = vunpack.c.l.b16 %v50
    %v99 = vunpack.c.l.b16 %v51
    %v100 = vunpack.c.l.b16 %v52
    %v101 = vunpack.c.l.b16 %v53
    %v102 = vunpack.c.l.b16 %v54
    %v103 = vunpack.c.l.b16 %v55
    %v104 = vunpack.c.l.b16 %v56
    %v105 = vpack.c.b16 %v90, %v89
    %v106 = vpack.c.b16 %v92, %v91
    %v107 = vpack.c.b16 %v94, %v93
    %v108 = vpack.c.b16 %v96, %v95
    %v109 = vpack.c.b16 %v98, %v97
    %v110 = vpack.c.b16 %v100, %v99
    %v111 = vpack.c.b16 %v102, %v101
    %v112 = vpack.c.b16 %v104, %v103
    %v137 = vunpack.c.l.b16 %v57
    %v138 = vunpack.c.l.b16 %v58
    %v139 = vunpack.c.l.b16 %v59
    %v140 = vunpack.c.l.b16 %v60
    %v141 = vunpack.c.l.b16 %v61
    %v142 = vunpack.c.l.b16 %v62
    %v143 = vunpack.c.l.b16 %v63
    %v144 = vunpack.c.l.b16 %v64
    %v145 = vunpack.c.l.b16 %v65
    %v146 = vunpack.c.l.b16 %v66
    %v147 = vunpack.c.l.b16 %v67
    %v148 = vunpack.c.l.b16 %v68
    %v149 = vunpack.c.l.b16 %v69
    %v150 = vunpack.c.l.b16 %v70
    %v151 = vunpack.c.l.b16 %v71
    %v152 = vunpack.c.l.b16 %v72
    %v153 = vpack.c.b16 %v138, %v137
    %v154 = vpack.c.b16 %v140, %v139
    %v155 = vpack.c.b16 %v142, %v141
    %v156 = vpack.c.b16 %v144, %v143
    %v157 = vpack.c.b16 %v146, %v145
    %v158 = vpack.c.b16 %v148, %v147
    %v159 = vpack.c.b16 %v150, %v149
    %v160 = vpack.c.b16 %v152, %v151
    %169 = vmatprep.subr.bf16.mxu0 0
    %170 = vmatpush1.bf16.msra.mxu0 %v160
    %171 = vmatprep.subr.bf16.mxu0 0
    %172 = vmatpush1.bf16.msra.mxu0 %v159
    %173 = vmatprep.subr.bf16.mxu0 0
    %174 = vmatpush1.bf16.msra.mxu0 %v158
    %175 = vmatprep.subr.bf16.mxu0 0
    %176 = vmatpush1.bf16.msra.mxu0 %v157
    %177 = vmatprep.subr.bf16.mxu0 0
    %178 = vmatpush1.bf16.msra.mxu0 %v156
    %179 = vmatprep.subr.bf16.mxu0 0
    %180 = vmatpush1.bf16.msra.mxu0 %v155
    %181 = vmatprep.subr.bf16.mxu0 0
    %182 = vmatpush1.bf16.msra.mxu0 %v154
    %183 = vmatprep.subr.bf16.mxu0 0
    %184 = vmatpush1.bf16.msra.mxu0 %v153
    %185 = vmatprep.subr.bf16.mxu0 0
    %186 = vmatpush2.bf16.msra.mxu0 0
    %187 = vmatprep.subr.bf16.mxu0 0
    %188 = vmatpush2.bf16.msra.mxu0 0
    %189 = vmatprep.subr.bf16.mxu0 0
    %190 = vmatpush2.bf16.msra.mxu0 0
    %191 = vmatprep.subr.bf16.mxu0 0
    %192 = vmatpush2.bf16.msra.mxu0 0
    %193 = vmatprep.subr.bf16.mxu0 0
    %194 = vmatpush2.bf16.msra.mxu0 0
    %195 = vmatprep.subr.bf16.mxu0 0
    %196 = vmatpush2.bf16.msra.mxu0 0
    %197 = vmatprep.subr.bf16.mxu0 0
    %198 = vmatpush2.bf16.msra.mxu0 0
    %199 = vmatprep.subr.bf16.mxu0 0
    %200 = vmatpush2.bf16.msra.mxu0 0
    %201 = vmatprep.mubr.bf16.mxu0 0
    %202 = vmatmul.mubr.bf16.gmra.mxu0 %v105
    %v203 = vpop.f32.mrf.mxu0
    %v204 = vadd.f32 0.0, %v203
    %v205 = vpop.f32.mrf.mxu0
    %v206 = vpop.f32.mrf.mxu0
    %v207 = vadd.f32 0.0, %v206
    %v208 = vpop.f32.mrf.mxu0
    %209 = vmatprep.mubr.bf16.mxu0 0
    %210 = vmatmul.mubr.bf16.gmra.mxu0 %v106
    %v211 = vpop.f32.mrf.mxu0
    %v212 = vadd.f32 0.0, %v211
    %v213 = vpop.f32.mrf.mxu0
    %v214 = vpop.f32.mrf.mxu0
    %v215 = vadd.f32 0.0, %v214
    %v216 = vpop.f32.mrf.mxu0
    %217 = vmatprep.mubr.bf16.mxu0 0
    %218 = vmatmul.mubr.bf16.gmra.mxu0 %v107
    %v219 = vpop.f32.mrf.mxu0
    %v220 = vadd.f32 0.0, %v219
    %v221 = vpop.f32.mrf.mxu0
    %v222 = vpop.f32.mrf.mxu0
    %v223 = vadd.f32 0.0, %v222
    %v224 = vpop.f32.mrf.mxu0
    %225 = vmatprep.mubr.bf16.mxu0 0
    %226 = vmatmul.mubr.bf16.gmra.mxu0 %v108
    %v227 = vpop.f32.mrf.mxu0
    %v228 = vadd.f32 0.0, %v227
    %v229 = vpop.f32.mrf.mxu0
    %v230 = vpop.f32.mrf.mxu0
    %v231 = vadd.f32 0.0, %v230
    %v232 = vpop.f32.mrf.mxu0
    %233 = vmatprep.mubr.bf16.mxu0 0
    %234 = vmatmul.mubr.bf16.gmra.mxu0 %v109
    %v235 = vpop.f32.mrf.mxu0
    %v236 = vadd.f32 0.0, %v235
    %v237 = vpop.f32.mrf.mxu0
    %v238 = vpop.f32.mrf.mxu0
    %v239 = vadd.f32 0.0, %v238
    %v240 = vpop.f32.mrf.mxu0
    %241 = vmatprep.mubr.bf16.mxu0 0
    %242 = vmatmul.mubr.bf16.gmra.mxu0 %v110
    %v243 = vpop.f32.mrf.mxu0
    %v244 = vadd.f32 0.0, %v243
    %v245 = vpop.f32.mrf.mxu0
    %v246 = vpop.f32.mrf.mxu0
    %v247 = vadd.f32 0.0, %v246
    %v248 = vpop.f32.mrf.mxu0
    %249 = vmatprep.mubr.bf16.mxu0 0
    %250 = vmatmul.mubr.bf16.gmra.mxu0 %v111
    %v251 = vpop.f32.mrf.mxu0
    %v252 = vadd.f32 0.0, %v251
    %v253 = vpop.f32.mrf.mxu0
    %v254 = vpop.f32.mrf.mxu0
    %v255 = vadd.f32 0.0, %v254
    %v256 = vpop.f32.mrf.mxu0
    %257 = vmatprep.mubr.bf16.mxu0 0
    %258 = vmatmul.mubr.bf16.gmra.mxu0 %v112
    %v259 = vpop.f32.mrf.mxu0
    %v260 = vadd.f32 0.0, %v259
    %v261 = vpop.f32.mrf.mxu0
    %v262 = vpop.f32.mrf.mxu0
    %v263 = vadd.f32 0.0, %v262
    %v264 = vpop.f32.mrf.mxu0
    %265 = vdwg.mxu0
    %v266 = vmul.f32 %v204, %v204
    %v267 = vmul.f32 %v207, %v207
    %v268 = vmul.f32 %v212, %v212
    %v269 = vmul.f32 %v215, %v215
    %v270 = vmul.f32 %v220, %v220
    %v271 = vmul.f32 %v223, %v223
    %v272 = vmul.f32 %v228, %v228
    %v273 = vmul.f32 %v231, %v231
    %v274 = vmul.f32 %v236, %v236
    %v275 = vmul.f32 %v239, %v239
    %v276 = vmul.f32 %v244, %v244
    %v277 = vmul.f32 %v247, %v247
    %v278 = vmul.f32 %v252, %v252
    %v279 = vmul.f32 %v255, %v255
    %v280 = vmul.f32 %v260, %v260
    %v281 = vmul.f32 %v263, %v263
    %282 = vadd.xlane.f32.xlu0 %v266
    %v283 = vpop.xlane.xlu0 %282
    %284 = vadd.xlane.f32.xlu0 %v267
    %v285 = vpop.xlane.xlu0 %284
    %286 = vadd.xlane.f32.xlu0 %v268
    %v287 = vpop.xlane.xlu0 %286
    %288 = vadd.xlane.f32.xlu0 %v269
    %v289 = vpop.xlane.xlu0 %288
    %290 = vadd.xlane.f32.xlu0 %v270
    %v291 = vpop.xlane.xlu0 %290
    %292 = vadd.xlane.f32.xlu0 %v271
    %v293 = vpop.xlane.xlu0 %292
    %294 = vadd.xlane.f32.xlu0 %v272
    %v295 = vpop.xlane.xlu0 %294
    %296 = vadd.xlane.f32.xlu0 %v273
    %v297 = vpop.xlane.xlu0 %296
    %298 = vadd.xlane.f32.xlu0 %v274
    %v299 = vpop.xlane.xlu0 %298
    %300 = vadd.xlane.f32.xlu0 %v275
    %v301 = vpop.xlane.xlu0 %300
    %302 = vadd.xlane.f32.xlu0 %v276
    %v303 = vpop.xlane.xlu0 %302
    %304 = vadd.xlane.f32.xlu0 %v277
    %v305 = vpop.xlane.xlu0 %304
    %306 = vadd.xlane.f32.xlu0 %v278
    %v307 = vpop.xlane.xlu0 %306
    %308 = vadd.xlane.f32.xlu0 %v279
    %v309 = vpop.xlane.xlu0 %308
    %310 = vadd.xlane.f32.xlu0 %v280
    %v311 = vpop.xlane.xlu0 %310
    %312 = vadd.xlane.f32.xlu0 %v281
    %v313 = vpop.xlane.xlu0 %312
    %v314 = vmax.f32 %v283, 1e-24
    %v315 = vmax.f32 %v285, 1e-24
    %v316 = vmax.f32 %v287, 1e-24
    %v317 = vmax.f32 %v289, 1e-24
    %v318 = vmax.f32 %v291, 1e-24
    %v319 = vmax.f32 %v293, 1e-24
    %v320 = vmax.f32 %v295, 1e-24
    %v321 = vmax.f32 %v297, 1e-24
    %v322 = vmax.f32 %v299, 1e-24
    %v323 = vmax.f32 %v301, 1e-24
    %v324 = vmax.f32 %v303, 1e-24
    %v325 = vmax.f32 %v305, 1e-24
    %v326 = vmax.f32 %v307, 1e-24
    %v327 = vmax.f32 %v309, 1e-24
    %v328 = vmax.f32 %v311, 1e-24
    %v329 = vmax.f32 %v313, 1e-24
    %v330 = vrsqrt.pop %v314
    %v331 = vrsqrt.pop %v315
    %v332 = vrsqrt.pop %v316
    %v333 = vrsqrt.pop %v317
    %v334 = vrsqrt.pop %v318
    %v335 = vrsqrt.pop %v319
    %v336 = vrsqrt.pop %v320
    %v337 = vrsqrt.pop %v321
    %v338 = vrsqrt.pop %v322
    %v339 = vrsqrt.pop %v323
    %v340 = vrsqrt.pop %v324
    %v341 = vrsqrt.pop %v325
    %v342 = vrsqrt.pop %v326
    %v343 = vrsqrt.pop %v327
    %v344 = vrsqrt.pop %v328
    %v345 = vrsqrt.pop %v329
    %v346 = vmul.f32 %v204, %v330
    %v347 = vmul.f32 %v207, %v331
    %v348 = vmul.f32 %v212, %v332
    %v349 = vmul.f32 %v215, %v333
    %v350 = vmul.f32 %v220, %v334
    %v351 = vmul.f32 %v223, %v335
    %v352 = vmul.f32 %v228, %v336
    %v353 = vmul.f32 %v231, %v337
    %v354 = vmul.f32 %v236, %v338
    %v355 = vmul.f32 %v239, %v339
    %v356 = vmul.f32 %v244, %v340
    %v357 = vmul.f32 %v247, %v341
    %v358 = vmul.f32 %v252, %v342
    %v359 = vmul.f32 %v255, %v343
    %v360 = vmul.f32 %v260, %v344
    %v361 = vmul.f32 %v263, %v345
    %362 = vst [vmem:[#allocation7] sm:$0xff] %v346
    %363 = vst [vmem:[#allocation7 + $0x8] sm:$0xff] %v347
    %364 = vst [vmem:[#allocation7 + $0x10] sm:$0xff] %v348
    %365 = vst [vmem:[#allocation7 + $0x18] sm:$0xff] %v349
    %366 = vst [vmem:[#allocation7 + $0x20] sm:$0xff] %v350
    %367 = vst [vmem:[#allocation7 + $0x28] sm:$0xff] %v351
    %368 = vst [vmem:[#allocation7 + $0x30] sm:$0xff] %v352
    %369 = vst [vmem:[#allocation7 + $0x38] sm:$0xff] %v353
    %370 = vst [vmem:[#allocation7 + $0x40] sm:$0xff] %v354
    %371 = vst [vmem:[#allocation7 + $0x48] sm:$0xff] %v355
    %372 = vst [vmem:[#allocation7 + $0x50] sm:$0xff] %v356
    %373 = vst [vmem:[#allocation7 + $0x58] sm:$0xff] %v357
    %374 = vst [vmem:[#allocation7 + $0x60] sm:$0xff] %v358
    %375 = vst [vmem:[#allocation7 + $0x68] sm:$0xff] %v359
    %376 = vst [vmem:[#allocation7 + $0x70] sm:$0xff] %v360
    %377 = vst [vmem:[#allocation7 + $0x78] sm:$0xff] %v361
    // Predicated region
    $region18: #{tpu_custom_call.1} parent=1 // pred_check
      _
    $region19: #{tpu_custom_call.1} parent=1 // pred_check_branch
      %379 = sbr.rel (0) target = $region21
    $region20: #{tpu_custom_call.1} parent=1 // pred_region
      %s381 = ssub.s32 2048, 2048
      %382 = vsyncadd [#allocation4], %s381
      %s383 = sshll.u32 [#allocation7], 4
      %s384 = int_to_ptr.vmem [resolvable:$true] %s383
      %389 = dma.vmem_to_hbm [thread:$0]  %s384, 2048, %s2, [#allocation4], 128, 128, 8
    $region21: #{tpu_custom_call.1} parent=1 // pred_fallthru
      _
    // Predicated region
    $region22: #{tpu_custom_call.1} parent=1 // pred_check
      _
    $region23: #{tpu_custom_call.1} parent=1 // pred_check_branch
      %391 = sbr.rel (0) target = $region25
    $region24: #{tpu_custom_call.1} parent=1 // pred_region
      %392 = dma.done [#allocation4], 2048
    $region25: #{tpu_custom_call.1} parent=1 // pred_fallthru
      _
    %393 = vsyncpa [#allocation3], 1
    %394 = vsyncpa [#allocation6], 1
    %395 = vsyncpa [#allocation4], 1

</llo_original>
